<compile_context>
chip_gen: v6e
topology: v6e:2x2x1
jax: 0.10.0
libtpu: 0.0.40
codegen_flags: <defaults>
</compile_context>

<pallas_src>
import functools

import jax
import jax.numpy as jnp
from jax import lax
from jax.experimental import pallas as pl
from jax.experimental.pallas import tpu as pltpu


def _round_up(x, m):
    return ((x + m - 1) // m) * m


def policy_net_kernel(x_ref, w1_ref, b1_ref, w2_ref, b2_ref, out_ref, *, out_dims):
    """One batch tile: fc1+ReLU, fc2+ReLU, masked softmax over the lane axis."""
    # fc1 + ReLU  (MXU matmul, f32 accumulate; bias/ReLU on the VPU in f32)
    h = jnp.dot(x_ref[...], w1_ref[...], preferred_element_type=jnp.float32)
    h = jnp.maximum(h + b1_ref[...], 0.0)                       # (TB, hidden)

    # fc2 + ReLU  (cast activations back to the MXU operand dtype)
    logits = jnp.dot(h.astype(w2_ref.dtype), w2_ref[...],
                     preferred_element_type=jnp.float32)
    logits = jnp.maximum(logits + b2_ref[...], 0.0)             # (TB, OUT_P)

    # Mask the lane padding (cols >= out_dims) so softmax ignores it.
    col = lax.broadcasted_iota(jnp.int32, logits.shape, 1)
    logits = jnp.where(col < out_dims, logits, jnp.float32(-1e30))

    # Numerically stable softmax over dim=1 with EXACT normalization so that
    # rows sum to 1 (approx reciprocal was not accurate enough).
    m = jnp.max(logits, axis=1, keepdims=True)
    e = jnp.exp(logits - m)
    denom = jnp.sum(e, axis=1, keepdims=True)                   # >= 1 always
    out_ref[...] = (e / denom).astype(out_ref.dtype)


def prepare_params(w1, b1, w2, b2, *, dot_dtype=jnp.bfloat16):
    """One-time param prep (hoisted out of the per-call path).

    Weights are cast to the MXU operand dtype; only the OUTPUT feature dim is
    zero-padded to a multiple of 128 so the kernel's store is lane-dense.
    in_dims / hidden stay unpadded (full-array blocks are legal)."""
    in_dims, hidden = w1.shape
    out_dims = w2.shape[1]
    out_p = _round_up(out_dims, 128)
    w1_p = w1.astype(dot_dtype)                                   # (in, hid)
    b1_p = b1.astype(jnp.float32).reshape(1, hidden)              # (1, hid)
    w2_p = jnp.zeros((hidden, out_p), dot_dtype).at[:, :out_dims].set(
        w2.astype(dot_dtype))                                     # (hid, OUT_P)
    b2_p = jnp.zeros((1, out_p), jnp.float32).at[:, :out_dims].set(
        b2.astype(jnp.float32))                                   # (1, OUT_P)
    return w1_p, b1_p, w2_p, b2_p


@functools.partial(jax.jit, static_argnames=("out_dims", "batch_tile"))
def policy_network_forward(x, w1_p, b1_p, w2_p, b2_p, *, out_dims,
                           batch_tile=2048):
    """x:(B,in_dims), prepared params -> softmax probs (B, out_dims)."""
    B, in_dims = x.shape
    hidden = w1_p.shape[1]
    out_pad = w2_p.shape[1]
    dot_dtype = w1_p.dtype

    # Batch tile: multiple of 16 sublanes (safe for bf16 packing, fine for
    # f32).  Cap at min(batch_tile, 4096) rows — double-buffered x+out tiles
    # stay a few MiB, well inside v7x's scoped VMEM.  For larger batches force
    # >= 2 grid steps so the "parallel" axis can use both v7x TensorCores.
    tb_cap = max(16, _round_up(min(batch_tile, 4096), 16))
    b16 = _round_up(B, 16)
    if b16 <= 256:
        TB = min(b16, tb_cap)                        # tiny batch: 1 step
    else:
        TB = min(tb_cap, _round_up((b16 + 1) // 2, 16))
    B_P = _round_up(b16, TB)

    # Cast x to the MXU operand dtype; pad batch rows only if needed.  This is
    # the only per-call data movement and it fuses under this jit.
    x_p = x.astype(dot_dtype)
    if B_P != B:
        x_p = jnp.zeros((B_P, in_dims), dot_dtype).at[:B, :].set(x_p)

    kernel = functools.partial(policy_net_kernel, out_dims=out_dims)

    out_p = pl.pallas_call(
        kernel,
        out_shape=jax.ShapeDtypeStruct((B_P, out_pad), jnp.float32),
        grid=(B_P // TB,),
        in_specs=[
            pl.BlockSpec((TB, in_dims), lambda i: (i, 0)),       # x: pipelined
            pl.BlockSpec((in_dims, hidden), lambda i: (0, 0)),   # w1: resident
            pl.BlockSpec((1, hidden), lambda i: (0, 0)),         # b1: resident
            pl.BlockSpec((hidden, out_pad), lambda i: (0, 0)),   # w2: resident
            pl.BlockSpec((1, out_pad), lambda i: (0, 0)),        # b2: resident
        ],
        out_specs=pl.BlockSpec((TB, out_pad), lambda i: (i, 0)),  # lane-dense
        compiler_params=pltpu.CompilerParams(
            dimension_semantics=("parallel",)),                  # v7x: 2 TCs
    )(x_p, w1_p, b1_p, w2_p, b2_p)

    # Slice back to the module's output shape; stays fused under this jit.
    return out_p[:B, :out_dims]


def init_params(key, in_dims, out_dims, hidden_size=128):
    """Matches the module's __init__: weights ~ U[0,1) (nn.init.uniform_),
       biases keep nn.Linear's default U[-1/sqrt(fan_in), 1/sqrt(fan_in))."""
    k1, k2, k3, k4 = jax.random.split(key, 4)
    # Stored transposed relative to torch's (out, in) so the kernel does x @ W.
    w1 = jax.random.uniform(k1, (in_dims, hidden_size), dtype=jnp.float32)
    w2 = jax.random.uniform(k2, (hidden_size, out_dims), dtype=jnp.float32)
    bnd1 = 1.0 / jnp.sqrt(in_dims)
    bnd2 = 1.0 / jnp.sqrt(hidden_size)
    b1 = jax.random.uniform(k3, (1, hidden_size), jnp.float32, -bnd1, bnd1)
    b2 = jax.random.uniform(k4, (1, out_dims), jnp.float32, -bnd2, bnd2)
    return w1, b1, w2, b2


def reference_forward(x, w1, b1, w2, b2, *, dot_dtype=jnp.bfloat16):
    """Pure-JAX reference with the same dot-operand dtype policy as the kernel."""
    h = jnp.dot(x.astype(dot_dtype), w1.astype(dot_dtype),
                preferred_element_type=jnp.float32)
    h = jnp.maximum(h + b1.astype(jnp.float32), 0.0)
    logits = jnp.dot(h.astype(dot_dtype), w2.astype(dot_dtype),
                     preferred_element_type=jnp.float32)
    logits = jnp.maximum(logits + b2.astype(jnp.float32), 0.0)
    return jax.nn.softmax(logits, axis=1)


if __name__ == "__main__":
    # Small shapes consistent with the module: batch=2 states of dim 16,
    # hidden=32, 8 actions.
    B, IN_DIMS, HIDDEN, OUT_DIMS = 2, 16, 32, 8

    key = jax.random.PRNGKey(0)
    kx, kp, kx2 = jax.random.split(key, 3)
    x = jax.random.normal(kx, (B, IN_DIMS), dtype=jnp.float32)
    w1, b1, w2, b2 = init_params(kp, IN_DIMS, OUT_DIMS, HIDDEN)

    # Pad/cast params ONCE (bf16 MXU operands on all TPU generations).
    params = prepare_params(w1, b1, w2, b2, dot_dtype=jnp.bfloat16)

    # --- small batch, single grid step ---
    probs = policy_network_forward(x, *params, out_dims=OUT_DIMS)
    probs = jax.block_until_ready(probs)
    ref = reference_forward(x, w1, b1, w2, b2, dot_dtype=jnp.bfloat16)
    assert probs.shape == (B, OUT_DIMS)
    assert jnp.allclose(probs, ref, atol=2e-3, rtol=2e-3)
    assert jnp.allclose(jnp.sum(probs, axis=1), 1.0, atol=1e-3)

    # --- larger batch (one lane-dense step; bigger batches auto-split into
    #     >=2 parallel steps for v7x's two TensorCores) ---
    B2 = 256
    x2 = jax.random.normal(kx2, (B2, IN_DIMS), dtype=jnp.float32)
    probs2 = policy_network_forward(x2, *params, out_dims=OUT_DIMS)
    probs2 = jax.block_until_ready(probs2)
    ref2 = reference_forward(x2, w1, b1, w2, b2, dot_dtype=jnp.bfloat16)
    assert probs2.shape == (B2, OUT_DIMS)
    assert jnp.allclose(probs2, ref2, atol=2e-3, rtol=2e-3)
    assert jnp.allclose(jnp.sum(probs2, axis=1), 1.0, atol=1e-3)

    # TODO(synk): act()'s Categorical sampling / log_prob / entropy are
    # host-side torch.distributions logic, not part of the forward kernel.
    print("KERNEL_OK")
</pallas_src>

<mosaic_0001>
module attributes {stable_mosaic.version = 11 : i64} {
  func.func @policy_net_kernel(%arg0: i32, %arg1: memref<16x16xbf16, #tpu.memory_space<vmem>>, %arg2: memref<16x32xbf16, #tpu.memory_space<vmem>>, %arg3: memref<1x32xf32, #tpu.memory_space<vmem>>, %arg4: memref<32x128xbf16, #tpu.memory_space<vmem>>, %arg5: memref<1x128xf32, #tpu.memory_space<vmem>>, %arg6: memref<16x128xf32, #tpu.memory_space<vmem>>) attributes {dimension_semantics = [#tpu.dimension_semantics<parallel>], iteration_bounds = array<i64: 1>, scalar_prefetch = 0 : i64, scratch_operands = 0 : i64, tpu.core_type = #tpu.core_type<tc>, window_params = [{transform_indices = @transform_0, window_bounds = array<i64: 16, 16>}, {pipeline_mode = #tpu.pipeline_mode<synchronous>, transform_indices = @transform_1, window_bounds = array<i64: 16, 32>}, {pipeline_mode = #tpu.pipeline_mode<synchronous>, transform_indices = @transform_2, window_bounds = array<i64: 1, 32>}, {pipeline_mode = #tpu.pipeline_mode<synchronous>, transform_indices = @transform_3, window_bounds = array<i64: 32, 128>}, {pipeline_mode = #tpu.pipeline_mode<synchronous>, transform_indices = @transform_4, window_bounds = array<i64: 1, 128>}, {transform_indices = @transform_5, window_bounds = array<i64: 16, 128>}]} {
    %c0 = arith.constant 0 : index
    %c0_0 = arith.constant 0 : index
    %0 = vector.load %arg1[%c0, %c0_0] : memref<16x16xbf16, #tpu.memory_space<vmem>>, vector<16x16xbf16>
    %c0_1 = arith.constant 0 : index
    %c0_2 = arith.constant 0 : index
    %1 = vector.load %arg2[%c0_1, %c0_2] : memref<16x32xbf16, #tpu.memory_space<vmem>>, vector<16x32xbf16>
    %cst = arith.constant dense<0.000000e+00> : vector<16x32xf32>
    %2 = tpu.matmul %0, %1, %cst {dimension_numbers = #tpu.dot_dimension_numbers<[1], [0], [0], [1], [0, 0, 1, 1], [], []>} : vector<16x16xbf16>, vector<16x32xbf16>, vector<16x32xf32> -> vector<16x32xf32>
    %c0_3 = arith.constant 0 : index
    %c0_4 = arith.constant 0 : index
    %3 = vector.load %arg3[%c0_3, %c0_4] : memref<1x32xf32, #tpu.memory_space<vmem>>, vector<1x32xf32>
    %4 = vector.broadcast %3 : vector<1x32xf32> to vector<16x32xf32>
    %5 = arith.addf %2, %4 : vector<16x32xf32>
    %cst_5 = arith.constant 0.000000e+00 : f32
    %6 = vector.broadcast %cst_5 : f32 to vector<16x32xf32>
    %7 = arith.maximumf %5, %6 : vector<16x32xf32>
    %8 = arith.truncf %7 : vector<16x32xf32> to vector<16x32xbf16>
    %c0_6 = arith.constant 0 : index
    %c0_7 = arith.constant 0 : index
    %9 = vector.load %arg4[%c0_6, %c0_7] : memref<32x128xbf16, #tpu.memory_space<vmem>>, vector<32x128xbf16>
    %cst_8 = arith.constant dense<0.000000e+00> : vector<16x128xf32>
    %10 = tpu.matmul %8, %9, %cst_8 {dimension_numbers = #tpu.dot_dimension_numbers<[1], [0], [0], [1], [0, 0, 1, 1], [], []>} : vector<16x32xbf16>, vector<32x128xbf16>, vector<16x128xf32> -> vector<16x128xf32>
    %c0_9 = arith.constant 0 : index
    %c0_10 = arith.constant 0 : index
    %11 = vector.load %arg5[%c0_9, %c0_10] : memref<1x128xf32, #tpu.memory_space<vmem>>, vector<1x128xf32>
    %12 = vector.broadcast %11 : vector<1x128xf32> to vector<16x128xf32>
    %13 = arith.addf %10, %12 : vector<16x128xf32>
    %cst_11 = arith.constant 0.000000e+00 : f32
    %14 = vector.broadcast %cst_11 : f32 to vector<16x128xf32>
    %15 = arith.maximumf %13, %14 : vector<16x128xf32>
    %16 = tpu.iota {dimensions = array<i32: 1>} : vector<16x128xi32>
    %c8_i32 = arith.constant 8 : i32
    %17 = vector.broadcast %c8_i32 : i32 to vector<16x128xi32>
    %18 = arith.cmpi slt, %16, %17 : vector<16x128xi32>
    %cst_12 = arith.constant -1.000000e+30 : f32
    %19 = vector.broadcast %cst_12 : f32 to vector<16x128xf32>
    %20 = arith.select %18, %15, %19 : vector<16x128xi1>, vector<16x128xf32>
    %cst_13 = arith.constant dense<0xFF800000> : vector<16xf32>
    %21 = vector.multi_reduction <maximumf>, %20, %cst_13 [1] : vector<16x128xf32> to vector<16xf32>
    %22 = vector.shape_cast %21 : vector<16xf32> to vector<16x1xf32>
    %23 = vector.broadcast %22 : vector<16x1xf32> to vector<16x128xf32>
    %24 = arith.subf %20, %23 : vector<16x128xf32>
    %25 = math.exp %24 : vector<16x128xf32>
    %cst_14 = arith.constant dense<0.000000e+00> : vector<16xf32>
    %26 = vector.multi_reduction <add>, %25, %cst_14 [1] : vector<16x128xf32> to vector<16xf32>
    %27 = vector.shape_cast %26 : vector<16xf32> to vector<16x1xf32>
    %28 = vector.broadcast %27 : vector<16x1xf32> to vector<16x128xf32>
    %29 = arith.divf %25, %28 : vector<16x128xf32>
    %c0_15 = arith.constant 0 : index
    %c0_16 = arith.constant 0 : index
    %30 = vector.load %arg6[%c0_15, %c0_16] : memref<16x128xf32, #tpu.memory_space<vmem>>, vector<16x128xf32>
    tpu.vector_store %arg6[%c0_15, %c0_16], %29 {strides = array<i32>} : memref<16x128xf32, #tpu.memory_space<vmem>>, vector<16x128xf32>,
    return
  }
  func.func @transform_0(%arg0: i32) -> (i32, i32) {
    %c0_i32 = arith.constant 0 : i32
    %c0_i32_0 = arith.constant 0 : i32
    return %arg0, %c0_i32 : i32, i32
  }
  func.func @transform_1(%arg0: i32) -> (i32, i32) {
    %c0_i32 = arith.constant 0 : i32
    %c0_i32_0 = arith.constant 0 : i32
    %c0_i32_1 = arith.constant 0 : i32
    return %c0_i32, %c0_i32_0 : i32, i32
  }
  func.func @transform_2(%arg0: i32) -> (i32, i32) {
    %c0_i32 = arith.constant 0 : i32
    %c0_i32_0 = arith.constant 0 : i32
    %c0_i32_1 = arith.constant 0 : i32
    return %c0_i32, %c0_i32_0 : i32, i32
  }
  func.func @transform_3(%arg0: i32) -> (i32, i32) {
    %c0_i32 = arith.constant 0 : i32
    %c0_i32_0 = arith.constant 0 : i32
    %c0_i32_1 = arith.constant 0 : i32
    return %c0_i32, %c0_i32_0 : i32, i32
  }
  func.func @transform_4(%arg0: i32) -> (i32, i32) {
    %c0_i32 = arith.constant 0 : i32
    %c0_i32_0 = arith.constant 0 : i32
    %c0_i32_1 = arith.constant 0 : i32
    return %c0_i32, %c0_i32_0 : i32, i32
  }
  func.func @transform_5(%arg0: i32) -> (i32, i32) {
    %c0_i32 = arith.constant 0 : i32
    %c0_i32_0 = arith.constant 0 : i32
    return %arg0, %c0_i32 : i32, i32
  }
}

</mosaic_0001>

<llo_original>
// kernel: policy_network_forward.1
$region0: #{policy_network_forward.1}
  #allocation0 [shape = 'u32[]', space=smem, size = 0x4, offset = 0x4, fixed_abs, tag = 'smem constant byte address 0x4 - core index']
  #allocation1 [shape = 'u32[144,128]{1,0:T(1,128)}', space=vmem, size = 0x12000, scoped, tag = 'internal scratch']
  %s0 = inlined_call_operand.vmem [shape: bf16[16,16], index: 0, kind: input, shape index: {}]
  %s1 = inlined_call_operand.hbm [shape: bf16[16,32], index: 1, kind: input, shape index: {}]
  %s2 = inlined_call_operand.vmem [shape: f32[1,32], index: 2, kind: input, shape index: {}]
  %s3 = inlined_call_operand.vmem [shape: bf16[32,128], index: 3, kind: input, shape index: {}]
  %s4 = inlined_call_operand.vmem [shape: f32[1,128], index: 4, kind: input, shape index: {}]
  %s5 = inlined_call_operand.vmem [shape: f32[16,128], index: 5, kind: output, shape index: {}]
  %s6 = sld [smem:[#allocation0]]
  $region34: #{policy_network_forward.1} parent=0
    _
  %s8 = ssub.s32 1, %s6
  %s9 = scalar_select 0, %s8, %s6
  $region1: #{policy_network_forward.1} parent=0
    #allocation2 [shape = 'u8[4096]{0}', space=vmem, size = 0x1000, scoped, tag = 'input window, operand 1, single buffered']
    #allocation3 [shape = 's32[1]{0}', space=sflag, size = 0x4, scoped, tag = 'scoped memory for policy_network_forward.1']
    %10 = vsyncpa [#allocation3], 0
    // Predicated region
    $region2: #{policy_network_forward.1} parent=1 // pred_check
      _
    $region3: #{policy_network_forward.1} parent=1 // pred_check_branch
      %12 = sbr.rel (0) target = $region5
    $region4: #{policy_network_forward.1} parent=1 // pred_region
      _
    $region5: #{policy_network_forward.1} parent=1 // pred_fallthru
      _
    // Predicated region
    $region6: #{policy_network_forward.1} parent=1 // pred_check
      _
    $region7: #{policy_network_forward.1} parent=1 // pred_check_branch
      %14 = sbr.rel (0) target = $region9
    $region8: #{policy_network_forward.1} parent=1 // pred_region
      %s16 = ssub.s32 128, 128
      %17 = vsyncadd [#allocation3], %s16
      %s18 = sshll.u32 [#allocation2], 4
      %s19 = int_to_ptr.vmem [resolvable:$true] %s18
      %24 = dma.hbm_to_vmem [thread:$0]  %s1, 128, %s19, [#allocation3], 64, 64, 4
    $region9: #{policy_network_forward.1} parent=1 // pred_fallthru
      _
    // Predicated region
    $region10: #{policy_network_forward.1} parent=1 // pred_check
      _
    $region11: #{policy_network_forward.1} parent=1 // pred_check_branch
      %26 = sbr.rel (0) target = $region13
    $region12: #{policy_network_forward.1} parent=1 // pred_region
      _
    $region13: #{policy_network_forward.1} parent=1 // pred_fallthru
      _
    // Predicated region
    $region14: #{policy_network_forward.1} parent=1 // pred_check
      _
    $region15: #{policy_network_forward.1} parent=1 // pred_check_branch
      %28 = sbr.rel (0) target = $region17
    $region16: #{policy_network_forward.1} parent=1 // pred_region
      _
    $region17: #{policy_network_forward.1} parent=1 // pred_fallthru
      _
    // Predicated region
    $region18: #{policy_network_forward.1} parent=1 // pred_check
      _
    $region19: #{policy_network_forward.1} parent=1 // pred_check_branch
      %30 = sbr.rel (0) target = $region21
    $region20: #{policy_network_forward.1} parent=1 // pred_region
      _
    $region21: #{policy_network_forward.1} parent=1 // pred_fallthru
      _
    // Predicated region
    $region22: #{policy_network_forward.1} parent=1 // pred_check
      _
    $region23: #{policy_network_forward.1} parent=1 // pred_check_branch
      %32 = sbr.rel (0) target = $region25
    $region24: #{policy_network_forward.1} parent=1 // pred_region
      %33 = dma.done [#allocation3], 128
    $region25: #{policy_network_forward.1} parent=1 // pred_fallthru
      _
    %v35 = vld [vmem:[%s0] sm:$0xf]
    %v36 = vld [vmem:[%s0 + $0x4] sm:$0xf]
    %v37 = vld [vmem:[#allocation2] sm:$0xf]
    %v38 = vld [vmem:[#allocation2 + $0x4] sm:$0xf]
    %v39 = vld [vmem:[%s2] sm:$0x1]
    %v41 = vlaneseq
    %v42 = vshrl.u32 %v41, 7
    %v43 = vsub.s32 0, %v42
    %v44 = vrot.slane %v39, %v43
    %v48 = vunpack.c.l.b16 %v35
    %v49 = vunpack.c.l.b16 %v36
    %v50 = vpack.c.b16 %v49, %v48
    %v53 = vunpack.c.l.b16 %v37
    %v54 = vunpack.c.l.b16 %v38
    %v55 = vpack.c.b16 %v54, %v53
    %vm57 = vcmask 130048
    %v59 = vsel %vm57, %v50, 0
    %61 = vmatprep.subr.bf16.mxu0 0
    %62 = vmatpush1.bf16.msra.mxu0 0
    %63 = vmatprep.subr.bf16.mxu0 0
    %64 = vmatpush1.bf16.msra.mxu0 0
    %65 = vmatprep.subr.bf16.mxu0 0
    %66 = vmatpush1.bf16.msra.mxu0 0
    %67 = vmatprep.subr.bf16.mxu0 0
    %68 = vmatpush1.bf16.msra.mxu0 0
    %69 = vmatprep.subr.bf16.mxu0 0
    %70 = vmatpush1.bf16.msra.mxu0 0
    %71 = vmatprep.subr.bf16.mxu0 0
    %72 = vmatpush1.bf16.msra.mxu0 0
    %73 = vmatprep.subr.bf16.mxu0 0
    %74 = vmatpush1.bf16.msra.mxu0 0
    %75 = vmatprep.subr.bf16.mxu0 0
    %76 = vmatpush1.bf16.msra.mxu0 %v55
    %77 = vmatprep.subr.bf16.mxu0 0
    %78 = vmatpush2.bf16.msra.mxu0 0
    %79 = vmatprep.subr.bf16.mxu0 0
    %80 = vmatpush2.bf16.msra.mxu0 0
    %81 = vmatprep.subr.bf16.mxu0 0
    %82 = vmatpush2.bf16.msra.mxu0 0
    %83 = vmatprep.subr.bf16.mxu0 0
    %84 = vmatpush2.bf16.msra.mxu0 0
    %85 = vmatprep.subr.bf16.mxu0 0
    %86 = vmatpush2.bf16.msra.mxu0 0
    %87 = vmatprep.subr.bf16.mxu0 0
    %88 = vmatpush2.bf16.msra.mxu0 0
    %89 = vmatprep.subr.bf16.mxu0 0
    %90 = vmatpush2.bf16.msra.mxu0 0
    %91 = vmatprep.subr.bf16.mxu0 0
    %92 = vmatpush2.bf16.msra.mxu0 0
    %93 = vmatprep.mubr.bf16.mxu0 0
    %94 = vmatmul.mubr.bf16.gmra.mxu0 %v59
    %v95 = vpop.f32.mrf.mxu0
    %v96 = vadd.f32 %v44, %v95
    %v97 = vpop.f32.mrf.mxu0
    %v98 = vpop.f32.mrf.mxu0
    %v99 = vadd.f32 %v44, %v98
    %v100 = vpop.f32.mrf.mxu0
    %101 = vdwg.mxu0
    %v102 = vmax.f32 %v96, 0.0
    %v103 = vmax.f32 %v99, 0.0
    %v104 = vpack.c.bf16 %v103, %v102
    %v105 = vld [vmem:[%s3] sm:$0xf]
    %v106 = vld [vmem:[%s3 + $0x4] sm:$0xf]
    %v107 = vld [vmem:[%s3 + $0x8] sm:$0xf]
    %v108 = vld [vmem:[%s3 + $0xc] sm:$0xf]
    %v109 = vld [vmem:[%s4] sm:$0x1]
    %v111 = vlaneseq
    %v112 = vshrl.u32 %v111, 7
    %v113 = vsub.s32 0, %v112
    %v114 = vrot.slane %v109, %v113
    %v120 = vunpack.c.l.b16 %v105
    %v121 = vunpack.c.l.b16 %v106
    %v122 = vunpack.c.l.b16 %v107
    %v123 = vunpack.c.l.b16 %v108
    %v124 = vpack.c.b16 %v121, %v120
    %v125 = vpack.c.b16 %v123, %v122
    %vm128 = vcmask 261120
    %v130 = vsel %vm128, %v104, 0
    %132 = vmatprep.subr.bf16.mxu0 0
    %133 = vmatpush1.bf16.msra.mxu0 0
    %134 = vmatprep.subr.bf16.mxu0 0
    %135 = vmatpush1.bf16.msra.mxu0 0
    %136 = vmatprep.subr.bf16.mxu0 0
    %137 = vmatpush1.bf16.msra.mxu0 0
    %138 = vmatprep.subr.bf16.mxu0 0
    %139 = vmatpush1.bf16.msra.mxu0 0
    %140 = vmatprep.subr.bf16.mxu0 0
    %141 = vmatpush1.bf16.msra.mxu0 0
    %142 = vmatprep.subr.bf16.mxu0 0
    %143 = vmatpush1.bf16.msra.mxu0 0
    %144 = vmatprep.subr.bf16.mxu0 0
    %145 = vmatpush1.bf16.msra.mxu0 %v125
    %146 = vmatprep.subr.bf16.mxu0 0
    %147 = vmatpush1.bf16.msra.mxu0 %v124
    %148 = vmatprep.subr.bf16.mxu0 0
    %149 = vmatpush2.bf16.msra.mxu0 0
    %150 = vmatprep.subr.bf16.mxu0 0
    %151 = vmatpush2.bf16.msra.mxu0 0
    %152 = vmatprep.subr.bf16.mxu0 0
    %153 = vmatpush2.bf16.msra.mxu0 0
    %154 = vmatprep.subr.bf16.mxu0 0
    %155 = vmatpush2.bf16.msra.mxu0 0
    %156 = vmatprep.subr.bf16.mxu0 0
    %157 = vmatpush2.bf16.msra.mxu0 0
    %158 = vmatprep.subr.bf16.mxu0 0
    %159 = vmatpush2.bf16.msra.mxu0 0
    %160 = vmatprep.subr.bf16.mxu0 0
    %161 = vmatpush2.bf16.msra.mxu0 0
    %162 = vmatprep.subr.bf16.mxu0 0
    %163 = vmatpush2.bf16.msra.mxu0 0
    %164 = vmatprep.mubr.bf16.mxu0 0
    %165 = vmatmul.mubr.bf16.gmra.mxu0 %v130
    %v166 = vpop.f32.mrf.mxu0
    %v167 = vadd.f32 %v114, %v166
    %v168 = vpop.f32.mrf.mxu0
    %v169 = vpop.f32.mrf.mxu0
    %v170 = vadd.f32 %v114, %v169
    %v171 = vpop.f32.mrf.mxu0
    %172 = vdwg.mxu0
    %v173 = vmax.f32 %v167, 0.0
    %v174 = vmax.f32 %v170, 0.0
    %v175 = vlaneseq
    %v176 = vand.u32 %v175, 127
    %vm177 = vcmp.lt.s32.totalorder %v176, 8
    %v178 = vsel %vm177, %v173, -1e+30
    %v179 = vsel %vm177, %v174, -1e+30
    %180 = vmax.xlane.f32.xlu0 %v178
    %v181 = vpop.xlane.xlu0 %180
    %182 = vmax.xlane.f32.xlu0 %v179
    %v183 = vpop.xlane.xlu0 %182
    %v184 = vsub.f32 %v178, %v181
    %v185 = vsub.f32 %v179, %v183
    %v186 = vmul.f32 %v184, 1.442695
    %v187 = vpow.pop %v186
    %v188 = vmul.f32 %v185, 1.442695
    %v189 = vpow.pop %v188
    %190 = vadd.xlane.f32.xlu0 %v187
    %v191 = vpop.xlane.xlu0 %190
    %192 = vadd.xlane.f32.xlu0 %v189
    %v193 = vpop.xlane.xlu0 %192
    %v194 = vrcp.pop %v191
    %v195 = vmul.f32 %v187, %v194
    %v196 = vrcp.pop %v193
    %v197 = vmul.f32 %v189, %v196
    %198 = vst [vmem:[%s5] sm:$0xff] %v195
    %199 = vst [vmem:[%s5 + $0x8] sm:$0xff] %v197
    // Predicated region
    $region26: #{policy_network_forward.1} parent=1 // pred_check
      _
    $region27: #{policy_network_forward.1} parent=1 // pred_check_branch
      %201 = sbr.rel (0) target = $region29
    $region28: #{policy_network_forward.1} parent=1 // pred_region
      _
    $region29: #{policy_network_forward.1} parent=1 // pred_fallthru
      _
    // Predicated region
    $region30: #{policy_network_forward.1} parent=1 // pred_check
      _
    $region31: #{policy_network_forward.1} parent=1 // pred_check_branch
      %203 = sbr.rel (0) target = $region33
    $region32: #{policy_network_forward.1} parent=1 // pred_region
      _
    $region33: #{policy_network_forward.1} parent=1 // pred_fallthru
      _
    %204 = vsyncpa [#allocation3], 1

</llo_original>
